<compile_context>
chip_gen: v5e
topology: v5e:2x2
jax: 0.10.0
libtpu: 0.0.40
codegen_flags: <defaults>
</compile_context>

<pallas_src>
import jax
import jax.numpy as jnp
from jax import lax
from jax.experimental import pallas as pl
from jax.experimental.pallas import tpu as pltpu

_BN_EPS = 1e-5
_INV_SQRT2 = 0.7071067811865475
_SQRT_2_OVER_PI = 0.7978845608028654


def _gelu(y, approximate):
    if approximate:
        # tanh-approx GELU: one EUP tanh per element (own bundle slot) instead of the
        # ~20-op VALU erf polynomial. Use when the VPU (not HBM) is the binding unit.
        return 0.5 * y * (1.0 + jnp.tanh(_SQRT_2_OVER_PI * (y + 0.044715 * y * y * y)))
    # Exact erf GELU (PyTorch nn.GELU default).
    return 0.5 * y * (1.0 + lax.erf(y * _INV_SQRT2))


def _pad_up(v, m):
    return -(-v // m) * m


def _divisors(n):
    out = set()
    d = 1
    while d * d <= n:
        if n % d == 0:
            out.add(d)
            out.add(n // d)
        d += 1
    return sorted(out)


def _vmem_capacity_bytes():
    try:
        return int(pltpu.get_tpu_info().vmem_capacity_bytes)
    except Exception:
        return 64 * 1024 * 1024  # conservative default (v7x per-core VMEM)


def pixel_wise_conv(x, weight, bias, *, hw_tile_target=2048, group_lane_target=2048,
                    gelu_approximate=False):
    """Fused 1x1-conv -> GELU -> per-group BatchNorm2d (training-mode statistics).

    x: (G, C, H, W) or (B, G, C, H, W); weight: (C, C); bias: (C,).
    Output dtype == x dtype (pass bf16 x for the bandwidth-bound fast path); matmul
    and BN statistics always accumulate in f32 inside the kernel.
    """
    orig_shape = x.shape
    if x.ndim == 5:
        b, g, c, h, w = x.shape
        x4 = x.reshape(b * g, c, h, w)
    elif x.ndim == 4:
        x4 = x
    else:
        raise ValueError(f"Unsupported input shape: {x.shape}")

    G, C, H, W = x4.shape
    HW = H * W
    x_flat = x4.reshape(G, C, HW)
    dtype = x_flat.dtype
    itm = jnp.dtype(dtype).itemsize
    sub = {4: 8, 2: 16, 1: 32}.get(itm, 8)           # sublane tiling for this dtype
    w_mat = weight.astype(dtype)                      # feeds the MXU in the I/O dtype
    b_col = bias.astype(jnp.float32).reshape(C, 1)    # added after f32 accumulation

    # ---- generation-aware VMEM budget (headroom for compiler scratch) ------------
    cap = _vmem_capacity_bytes()
    budget = max(32 * 1024 * 1024, cap - max(8 * 1024 * 1024, cap // 8))

    w_bytes = _pad_up(C, sub) * _pad_up(C, 128) * itm     # single-buffered weight
    b_bytes = _pad_up(C, 8) * 128 * 4                     # single-buffered f32 bias

    def _vmem_limit(est):
        return int(max(16 * 1024 * 1024,
                       min(cap - 4 * 1024 * 1024,
                           max(32 * 1024 * 1024, int(est * 1.25) + (4 << 20)))))

    # ==========================================================================
    # Path B: HW < 128 -> lane-dense (C, G*HW) layout (fixes masked-vst lane waste)
    # ==========================================================================
    def _est_lane(gb_):
        blk = _pad_up(C, sub) * _pad_up(gb_ * HW, 128) * itm
        return w_bytes + b_bytes + 2 * blk + 2 * blk      # in + out, double-buffered

    use_lane_dense = False
    gb_lane = None
    if HW < 128:
        max_gb = max(1, group_lane_target // max(HW, 1))
        lane_divs = [d for d in _divisors(G) if (d * HW) % 128 == 0 and d <= max_gb]
        if lane_divs:
            gb_lane = max(lane_divs)
            # Keep >= 2 grid steps so the "parallel" axis shards across v7x's 2 TCs.
            if G // gb_lane < 2:
                two_step = [d for d in lane_divs if G // d >= 2]
                if two_step:
                    gb_lane = max(two_step)
            while gb_lane is not None and _est_lane(gb_lane) > budget:
                smaller = [d for d in lane_divs if d < gb_lane]
                gb_lane = max(smaller) if smaller else None
        if gb_lane is None and _est_lane(G) <= budget:
            gb_lane = G            # single full-lane-extent block (always layout-legal)
        use_lane_dense = gb_lane is not None

    if use_lane_dense:
        gb = gb_lane
        L = gb * HW
        n_blk = G // gb
        x_lane = jnp.transpose(x_flat, (1, 0, 2)).reshape(C, G * HW)  # layout plumbing

        def lane_kernel(w_ref, b_ref, x_ref, o_ref):
            w_t = w_ref[...]                                        # (C, C)
            xg = x_ref[...]                                         # (C, L)
            y = jnp.dot(w_t, xg, preferred_element_type=jnp.float32) + b_ref[...]
            z = _gelu(y, gelu_approximate)                          # (C, L) f32
            inv_n = jnp.float32(1.0 / HW)
            if gb == 1:
                mean = jnp.sum(z, axis=-1, keepdims=True) * inv_n
                var = jnp.sum(z * z, axis=-1, keepdims=True) * inv_n - mean * mean
                scale = lax.rsqrt(var + jnp.float32(_BN_EPS))
                o_ref[...] = ((z - mean) * scale).astype(o_ref.dtype)
            else:
                # Per-group BN stats via two small MXU segment matmuls against a
                # one-hot lane->group matrix (keeps the hot path lane-dense and
                # avoids XLU relayouts from sub-128 lane slices / reshapes).
                row_g = lax.broadcasted_iota(jnp.int32, (L, gb), 0) // HW
                col_g = lax.broadcasted_iota(jnp.int32, (L, gb), 1)
                seg = (row_g == col_g).astype(jnp.float32)          # (L, gb)
                mean = jnp.dot(z, seg, preferred_element_type=jnp.float32) * inv_n
                msq = jnp.dot(z * z, seg, preferred_element_type=jnp.float32) * inv_n
                # NOTE: E[z^2]-mean^2 in f32 (cancellation-prone form; fine post-GELU
                # at these HW).
                var = msq - mean * mean
                scale = lax.rsqrt(var + jnp.float32(_BN_EPS))       # (C, gb)
                row_t = lax.broadcasted_iota(jnp.int32, (gb, L), 0)
                col_t = lax.broadcasted_iota(jnp.int32, (gb, L), 1) // HW
                seg_t = (row_t == col_t).astype(jnp.float32)        # (gb, L)
                mean_l = jnp.dot(mean, seg_t, preferred_element_type=jnp.float32)
                scale_l = jnp.dot(scale, seg_t, preferred_element_type=jnp.float32)
                o_ref[...] = ((z - mean_l) * scale_l).astype(o_ref.dtype)

        out_lane = pl.pallas_call(
            lane_kernel,
            out_shape=jax.ShapeDtypeStruct((C, G * HW), dtype),
            grid_spec=pltpu.PrefetchScalarGridSpec(
                num_scalar_prefetch=0,
                grid=(n_blk,),
                in_specs=[
                    # Constant-index weight / bias: fetched once, single-buffered.
                    pl.BlockSpec((C, C), lambda gi: (0, 0), pipeline_mode=pl.Buffered(1)),
                    pl.BlockSpec((C, 1), lambda gi: (0, 0), pipeline_mode=pl.Buffered(1)),
                    pl.BlockSpec((C, L), lambda gi: (0, gi)),
                ],
                out_specs=pl.BlockSpec((C, L), lambda gi: (0, gi)),
            ),
            compiler_params=pltpu.CompilerParams(
                dimension_semantics=("parallel",),
                vmem_limit_bytes=_vmem_limit(_est_lane(gb)),
            ),
        )(w_mat, b_col, x_lane)

        out = jnp.transpose(out_lane.reshape(C, G, HW), (1, 0, 2))
        return out.reshape(orig_shape)

    # ==========================================================================
    # Path A: HW >= 128 (or lane-dense path unavailable) -> (G, C, HW) layout
    # ==========================================================================
    if HW > hw_tile_target:
        gb = 1
        thw = 0
        # Bias the tile search to 256 multiples (v6e/v7x 2x256x256 MXU), then 128.
        for step in (256, 128):
            t_cap = (hw_tile_target // step) * step
            for cand in range(t_cap, step - 1, -step):
                if HW % cand == 0:
                    thw = cand
                    break
            if thw:
                break
        if thw:
            n_hw = HW // thw
            HW_pad = HW
        else:
            # Remainder path: pad HW to a 128-aligned tile multiple and mask the pad
            # lanes out of the BN statistics (streaming stays active).
            thw = max(128, (hw_tile_target // 128) * 128)
            n_hw = -(-HW // thw)
            HW_pad = n_hw * thw
    else:
        thw = HW
        n_hw = 1
        HW_pad = HW
        gb = 1
        max_gb = min(G, 8, max(1, group_lane_target // max(HW, 1)))  # cap unroll at 8
        for cand in range(max_gb, 0, -1):
            if G % cand == 0:
                gb = cand
                break
        # Prefer >= 2 grid steps so the "parallel" group axis shards across 2 TCs.
        if gb > 1 and G // gb < 2:
            for cand in range(gb - 1, 0, -1):
                if G % cand == 0 and G // cand >= 2:
                    gb = cand
                    break

    valid_last = HW - (n_hw - 1) * thw
    has_pad = HW_pad != HW

    def _est_a(gb_, out_bufs):
        return (w_bytes + b_bytes
                + 2 * gb_ * _pad_up(C, sub) * _pad_up(thw, 128) * itm     # streamed in
                + out_bufs * gb_ * _pad_up(C, sub) * _pad_up(HW_pad, 128) * itm  # resident out
                + 2 * gb_ * _pad_up(C, 8) * 128 * 4)                      # sum / sumsq

    out_bufs = 2
    while _est_a(gb, out_bufs) > budget and gb > 1:
        new_gb = 1
        for cand in range(gb - 1, 0, -1):
            if G % cand == 0:
                new_gb = cand
                break
        gb = new_gb
    if _est_a(gb, out_bufs) > budget:
        # The resident (C, HW) output alone exceeds the budget: degrade to a single
        # output buffer (serializes group writeback) rather than failing to compile.
        # TODO(synk): two-pass stats+normalize fallback for HW too large to keep resident.
        out_bufs = 1
    est = _est_a(gb, out_bufs)

    def kernel(w_ref, b_ref, x_ref, o_ref, sum_ref, sq_ref):
        hi = pl.program_id(1)

        @pl.when(hi == 0)
        def _init():
            sum_ref[...] = jnp.zeros_like(sum_ref)
            sq_ref[...] = jnp.zeros_like(sq_ref)

        w_t = w_ref[...]                                   # (C, C), I/O dtype
        if gb > 1:
            # Hoist the bias broadcast out of the unroll (no CSE of broadcast_in_dim).
            bias_b = jnp.broadcast_to(b_ref[...], (C, thw))
        else:
            bias_b = b_ref[...]                            # (C, 1) f32

        if has_pad:
            lane = lax.broadcasted_iota(jnp.int32, (C, thw), 1)
            n_valid = jnp.where(hi == n_hw - 1, valid_last, thw)
            stat_mask = (lane < n_valid).astype(jnp.float32)

        for g in range(gb):                                # static unroll, gb <= 8
            xg = x_ref[g]                                  # (C, thw)
            y = jnp.dot(w_t, xg, preferred_element_type=jnp.float32) + bias_b
            z = _gelu(y, gelu_approximate)
            zm = z * stat_mask if has_pad else z
            # Streaming BN statistics in f32. NOTE: E[z^2]-mean^2 form (cancellation-
            # prone); fine for post-GELU activations at these HW.
            sum_ref[g] += jnp.sum(zm, axis=-1, keepdims=True)
            sq_ref[g] += jnp.sum(z * zm, axis=-1, keepdims=True)
            if n_hw == 1:
                o_ref[g] = z.astype(o_ref.dtype)
            else:
                start = pl.multiple_of(hi * thw, 128)
                o_ref[g, :, pl.ds(start, thw)] = z.astype(o_ref.dtype)

        @pl.when(hi == n_hw - 1)
        def _finalize():
            inv_n = jnp.float32(1.0 / HW)
            for g in range(gb):
                mean = sum_ref[g] * inv_n                           # (C, 1)
                var = sq_ref[g] * inv_n - mean * mean               # biased variance
                scale = lax.rsqrt(var + jnp.float32(_BN_EPS))       # gamma=1, beta=0
                # Normalize in thw-sized chunks: caps the hidden f32 temporary at
                # C*thw*4 bytes instead of a whole (C, HW) slab.
                # (bf16 I/O: stats come from unrounded f32 z, normalization applies to
                #  the bf16-rounded staged z -- within bf16 tolerance.)
                if n_hw == 1:
                    zg = o_ref[g].astype(jnp.float32)
                    o_ref[g] = ((zg - mean) * scale).astype(o_ref.dtype)
                elif n_hw <= 8:
                    for t in range(n_hw):
                        start = t * thw
                        blk = o_ref[g, :, pl.ds(start, thw)].astype(jnp.float32)
                        o_ref[g, :, pl.ds(start, thw)] = (
                            (blk - mean) * scale).astype(o_ref.dtype)
                else:
                    def _chunk(t, carry):
                        start = pl.multiple_of(t * thw, 128)
                        blk = o_ref[g, :, pl.ds(start, thw)].astype(jnp.float32)
                        o_ref[g, :, pl.ds(start, thw)] = (
                            (blk - mean) * scale).astype(o_ref.dtype)
                        return carry
                    lax.fori_loop(0, n_hw, _chunk, 0)

    x_in = x_flat
    if has_pad:
        x_in = jnp.pad(x_flat, ((0, 0), (0, 0), (0, HW_pad - HW)))

    out_spec_kwargs = {}
    if out_bufs == 1:
        out_spec_kwargs["pipeline_mode"] = pl.Buffered(1)

    out = pl.pallas_call(
        kernel,
        out_shape=jax.ShapeDtypeStruct((G, C, HW_pad), dtype),
        grid_spec=pltpu.PrefetchScalarGridSpec(
            num_scalar_prefetch=0,
            grid=(G // gb, n_hw),
            in_specs=[
                # Constant-index weight / bias: fetched once, single-buffered.
                pl.BlockSpec((C, C), lambda gi, hi: (0, 0), pipeline_mode=pl.Buffered(1)),
                pl.BlockSpec((C, 1), lambda gi, hi: (0, 0), pipeline_mode=pl.Buffered(1)),
                # Streamed, double-buffered input tiles.
                pl.BlockSpec((gb, C, thw), lambda gi, hi: (gi, 0, hi)),
            ],
            # Output block stays VMEM-resident across the HW ("arbitrary") axis.
            out_specs=pl.BlockSpec((gb, C, HW_pad), lambda gi, hi: (gi, 0, 0),
                                   **out_spec_kwargs),
            scratch_shapes=[
                pltpu.VMEM((gb, C, 1), jnp.float32),   # per-channel sum
                pltpu.VMEM((gb, C, 1), jnp.float32),   # per-channel sum of squares
            ],
        ),
        compiler_params=pltpu.CompilerParams(
            dimension_semantics=("parallel", "arbitrary"),
            vmem_limit_bytes=_vmem_limit(est),
        ),
    )(w_mat, b_col, x_in)

    if has_pad:
        out = out[:, :, :HW]
    return out.reshape(orig_shape)


def _reference(x, weight, bias):
    # Pure-JAX reference mirroring the PyTorch forward (4-D input).
    G, C, H, W = x.shape
    xf = x.reshape(G, C, H * W)
    y = jnp.einsum("oc,gcp->gop", weight, xf) + bias[None, :, None]
    z = 0.5 * y * (1.0 + lax.erf(y * _INV_SQRT2))
    mean = jnp.mean(z, axis=-1, keepdims=True)
    var = jnp.mean((z - mean) ** 2, axis=-1, keepdims=True)
    o = (z - mean) / jnp.sqrt(var + _BN_EPS)
    return o.reshape(G, C, H, W)


if __name__ == "__main__":
    key = jax.random.PRNGKey(0)
    k_x, k_w, k_b, k_x5, k_xr = jax.random.split(key, 5)

    G, C, H, W = 2, 4, 16, 16
    x = jax.random.normal(k_x, (G, C, H, W), dtype=jnp.float32)

    # Deterministic synthetic Conv2d(C, C, 1) parameters (PyTorch-like scale).
    bound = 1.0 / (float(C) ** 0.5)
    weight = jax.random.uniform(k_w, (C, C), jnp.float32, -bound, bound)
    bias = jax.random.uniform(k_b, (C,), jnp.float32, -bound, bound)

    ref = _reference(x, weight, bias)

    # 1) f32 path (Path A, single spatial tile).
    out = jax.block_until_ready(pixel_wise_conv(x, weight, bias))
    assert out.shape == x.shape
    assert jnp.allclose(out, ref, atol=5e-4, rtol=5e-4)

    # 2) Forced HW streaming path (multi-tile accumulator + chunked fused BN finalize).
    out_tiled = jax.block_until_ready(pixel_wise_conv(x, weight, bias, hw_tile_target=128))
    assert jnp.allclose(out_tiled, ref, atol=5e-4, rtol=5e-4)

    # 3) bf16 I/O path (memory-bound fast path; f32 accumulation inside the kernel).
    x_bf = x.astype(jnp.bfloat16)
    ref_bf = _reference(x_bf.astype(jnp.float32),
                        weight.astype(jnp.bfloat16).astype(jnp.float32), bias)
    out_bf = jax.block_until_ready(pixel_wise_conv(x_bf, weight, bias))
    assert out_bf.dtype == jnp.bfloat16
    assert jnp.allclose(out_bf.astype(jnp.float32), ref_bf, atol=5e-2, rtol=5e-2)

    # 4) 5-D path (b, g, c, h, w): HW=64 < 128 -> lane-dense group-batched path.
    x5 = jax.random.normal(k_x5, (2, 3, C, 8, 8), dtype=jnp.float32)
    out5 = jax.block_until_ready(pixel_wise_conv(x5, weight, bias))
    ref5 = _reference(x5.reshape(6, C, 8, 8), weight, bias).reshape(x5.shape)
    assert out5.shape == x5.shape
    assert jnp.allclose(out5, ref5, atol=5e-4, rtol=5e-4)

    # 5) Single small group (lane-dense path with gb == 1, full-extent block).
    x1 = jax.random.normal(k_xr, (1, C, 8, 8), dtype=jnp.float32)
    out1 = jax.block_until_ready(pixel_wise_conv(x1, weight, bias))
    assert jnp.allclose(out1, _reference(x1, weight, bias), atol=5e-4, rtol=5e-4)

    # 6) Awkward HW (13x13 = 169, no 128-multiple divisor): padded + masked-stat path.
    xr = jax.random.normal(k_xr, (1, C, 13, 13), dtype=jnp.float32)
    out_r = jax.block_until_ready(pixel_wise_conv(xr, weight, bias, hw_tile_target=128))
    assert jnp.allclose(out_r, _reference(xr, weight, bias), atol=5e-4, rtol=5e-4)

    # 7) tanh-approx GELU lever (for VALU-bound regimes); loose tolerance vs exact ref.
    out_tanh = jax.block_until_ready(pixel_wise_conv(x, weight, bias, gelu_approximate=True))
    assert jnp.allclose(out_tanh, ref, atol=2e-2, rtol=2e-2)

    print("KERNEL_OK")
</pallas_src>

<mosaic_0001>
module attributes {stable_mosaic.version = 11 : i64} {
  func.func @kernel(%arg0: i32, %arg1: i32, %arg2: memref<4x4xf32, #tpu.memory_space<vmem>>, %arg3: memref<4x1xf32, #tpu.memory_space<vmem>>, %arg4: memref<1x4x256xf32, #tpu.memory_space<vmem>>, %arg5: memref<1x4x256xf32, #tpu.memory_space<vmem>>, %arg6: memref<1x4x1xf32, #tpu.memory_space<vmem>>, %arg7: memref<1x4x1xf32, #tpu.memory_space<vmem>>) attributes {dimension_semantics = [#tpu.dimension_semantics<parallel>, #tpu.dimension_semantics<arbitrary>], iteration_bounds = array<i64: 2, 1>, scalar_prefetch = 0 : i64, scratch_operands = 2 : i64, tpu.core_type = #tpu.core_type<tc>, window_params = [{pipeline_mode = #tpu.pipeline_mode<synchronous>, transform_indices = @transform_0, window_bounds = array<i64: 4, 4>}, {pipeline_mode = #tpu.pipeline_mode<synchronous>, transform_indices = @transform_1, window_bounds = array<i64: 4, 1>}, {transform_indices = @transform_2, window_bounds = array<i64: 1, 4, 256>}, {transform_indices = @transform_3, window_bounds = array<i64: 1, 4, 256>}]} {
    %c0_i32 = arith.constant 0 : i32
    %0 = arith.cmpi eq, %arg1, %c0_i32 : i32
    %1 = arith.extui %0 : i1 to i32
    %c0_i32_0 = arith.constant 0 : i32
    %2 = arith.cmpi ne, %1, %c0_i32_0 : i32
    scf.if %2 {
      %cst_29 = arith.constant 0.000000e+00 : f32
      %41 = vector.broadcast %cst_29 : f32 to vector<1x4x1xf32>
      %c0_30 = arith.constant 0 : index
      %c0_31 = arith.constant 0 : index
      %c0_32 = arith.constant 0 : index
      %42 = vector.load %arg6[%c0_30, %c0_31, %c0_32] : memref<1x4x1xf32, #tpu.memory_space<vmem>>, vector<1x4x1xf32>
      tpu.vector_store %arg6[%c0_30, %c0_31, %c0_32], %41 {strides = array<i32>} : memref<1x4x1xf32, #tpu.memory_space<vmem>>, vector<1x4x1xf32>,
      %cst_33 = arith.constant 0.000000e+00 : f32
      %43 = vector.broadcast %cst_33 : f32 to vector<1x4x1xf32>
      %c0_34 = arith.constant 0 : index
      %c0_35 = arith.constant 0 : index
      %c0_36 = arith.constant 0 : index
      %44 = vector.load %arg7[%c0_34, %c0_35, %c0_36] : memref<1x4x1xf32, #tpu.memory_space<vmem>>, vector<1x4x1xf32>
      tpu.vector_store %arg7[%c0_34, %c0_35, %c0_36], %43 {strides = array<i32>} : memref<1x4x1xf32, #tpu.memory_space<vmem>>, vector<1x4x1xf32>,
    } else {
    }
    %c0 = arith.constant 0 : index
    %c0_1 = arith.constant 0 : index
    %3 = vector.load %arg2[%c0, %c0_1] : memref<4x4xf32, #tpu.memory_space<vmem>>, vector<4x4xf32>
    %c0_2 = arith.constant 0 : index
    %c0_3 = arith.constant 0 : index
    %4 = vector.load %arg3[%c0_2, %c0_3] : memref<4x1xf32, #tpu.memory_space<vmem>>, vector<4x1xf32>
    %c0_4 = arith.constant 0 : index
    %c0_5 = arith.constant 0 : index
    %c0_6 = arith.constant 0 : index
    %5 = vector.load %arg4[%c0_4, %c0_5, %c0_6] : memref<1x4x256xf32, #tpu.memory_space<vmem>>, vector<1x4x256xf32>
    %6 = vector.shape_cast %5 : vector<1x4x256xf32> to vector<4x256xf32>
    %cst = arith.constant dense<0.000000e+00> : vector<4x256xf32>
    %7 = tpu.matmul %3, %6, %cst {dimension_numbers = #tpu.dot_dimension_numbers<[1], [0], [0], [1], [0, 0, 1, 1], [], []>} : vector<4x4xf32>, vector<4x256xf32>, vector<4x256xf32> -> vector<4x256xf32>
    %8 = vector.broadcast %4 : vector<4x1xf32> to vector<4x256xf32>
    %9 = arith.addf %7, %8 : vector<4x256xf32>
    %cst_7 = arith.constant 5.000000e-01 : f32
    %10 = vector.broadcast %cst_7 : f32 to vector<4x256xf32>
    %11 = arith.mulf %10, %9 : vector<4x256xf32>
    %cst_8 = arith.constant 0.707106769 : f32
    %12 = vector.broadcast %cst_8 : f32 to vector<4x256xf32>
    %13 = arith.mulf %9, %12 : vector<4x256xf32>
    %14 = math.erf %13 : vector<4x256xf32>
    %cst_9 = arith.constant 1.000000e+00 : f32
    %15 = vector.broadcast %cst_9 : f32 to vector<4x256xf32>
    %16 = arith.addf %15, %14 : vector<4x256xf32>
    %17 = arith.mulf %11, %16 : vector<4x256xf32>
    %c0_10 = arith.constant 0 : index
    %c0_11 = arith.constant 0 : index
    %c0_12 = arith.constant 0 : index
    %18 = vector.load %arg6[%c0_10, %c0_11, %c0_12] : memref<1x4x1xf32, #tpu.memory_space<vmem>>, vector<1x4x1xf32>
    %19 = vector.shape_cast %18 : vector<1x4x1xf32> to vector<4x1xf32>
    %cst_13 = arith.constant dense<0.000000e+00> : vector<4xf32>
    %20 = vector.multi_reduction <add>, %17, %cst_13 [1] : vector<4x256xf32> to vector<4xf32>
    %21 = vector.shape_cast %20 : vector<4xf32> to vector<4x1xf32>
    %22 = arith.addf %19, %21 : vector<4x1xf32>
    %c0_14 = arith.constant 0 : index
    %c0_15 = arith.constant 0 : index
    %c0_16 = arith.constant 0 : index
    %23 = vector.load %arg6[%c0_14, %c0_15, %c0_16] : memref<1x4x1xf32, #tpu.memory_space<vmem>>, vector<1x4x1xf32>
    %24 = vector.shape_cast %23 : vector<1x4x1xf32> to vector<4x1xf32>
    %25 = vector.shape_cast %22 : vector<4x1xf32> to vector<1x4x1xf32>
    tpu.vector_store %arg6[%c0_14, %c0_15, %c0_16], %25 {strides = array<i32>} : memref<1x4x1xf32, #tpu.memory_space<vmem>>, vector<1x4x1xf32>,
    %c0_17 = arith.constant 0 : index
    %c0_18 = arith.constant 0 : index
    %c0_19 = arith.constant 0 : index
    %26 = vector.load %arg7[%c0_17, %c0_18, %c0_19] : memref<1x4x1xf32, #tpu.memory_space<vmem>>, vector<1x4x1xf32>
    %27 = vector.shape_cast %26 : vector<1x4x1xf32> to vector<4x1xf32>
    %28 = arith.mulf %17, %17 : vector<4x256xf32>
    %cst_20 = arith.constant dense<0.000000e+00> : vector<4xf32>
    %29 = vector.multi_reduction <add>, %28, %cst_20 [1] : vector<4x256xf32> to vector<4xf32>
    %30 = vector.shape_cast %29 : vector<4xf32> to vector<4x1xf32>
    %31 = arith.addf %27, %30 : vector<4x1xf32>
    %c0_21 = arith.constant 0 : index
    %c0_22 = arith.constant 0 : index
    %c0_23 = arith.constant 0 : index
    %32 = vector.load %arg7[%c0_21, %c0_22, %c0_23] : memref<1x4x1xf32, #tpu.memory_space<vmem>>, vector<1x4x1xf32>
    %33 = vector.shape_cast %32 : vector<1x4x1xf32> to vector<4x1xf32>
    %34 = vector.shape_cast %31 : vector<4x1xf32> to vector<1x4x1xf32>
    tpu.vector_store %arg7[%c0_21, %c0_22, %c0_23], %34 {strides = array<i32>} : memref<1x4x1xf32, #tpu.memory_space<vmem>>, vector<1x4x1xf32>,
    %c0_24 = arith.constant 0 : index
    %c0_25 = arith.constant 0 : index
    %c0_26 = arith.constant 0 : index
    %35 = vector.load %arg5[%c0_24, %c0_25, %c0_26] : memref<1x4x256xf32, #tpu.memory_space<vmem>>, vector<1x4x256xf32>
    %36 = vector.shape_cast %35 : vector<1x4x256xf32> to vector<4x256xf32>
    %37 = vector.shape_cast %17 : vector<4x256xf32> to vector<1x4x256xf32>
    tpu.vector_store %arg5[%c0_24, %c0_25, %c0_26], %37 {strides = array<i32>} : memref<1x4x256xf32, #tpu.memory_space<vmem>>, vector<1x4x256xf32>,
    %c0_i32_27 = arith.constant 0 : i32
    %38 = arith.cmpi eq, %arg1, %c0_i32_27 : i32
    %39 = arith.extui %38 : i1 to i32
    %c0_i32_28 = arith.constant 0 : i32
    %40 = arith.cmpi ne, %39, %c0_i32_28 : i32
    scf.if %40 {
      %c0_29 = arith.constant 0 : index
      %c0_30 = arith.constant 0 : index
      %c0_31 = arith.constant 0 : index
      %41 = vector.load %arg6[%c0_29, %c0_30, %c0_31] : memref<1x4x1xf32, #tpu.memory_space<vmem>>, vector<1x4x1xf32>
      %42 = vector.shape_cast %41 : vector<1x4x1xf32> to vector<4x1xf32>
      %cst_32 = arith.constant 3.906250e-03 : f32
      %43 = vector.broadcast %cst_32 : f32 to vector<4x1xf32>
      %44 = arith.mulf %42, %43 : vector<4x1xf32>
      %c0_33 = arith.constant 0 : index
      %c0_34 = arith.constant 0 : index
      %c0_35 = arith.constant 0 : index
      %45 = vector.load %arg7[%c0_33, %c0_34, %c0_35] : memref<1x4x1xf32, #tpu.memory_space<vmem>>, vector<1x4x1xf32>
      %46 = vector.shape_cast %45 : vector<1x4x1xf32> to vector<4x1xf32>
      %cst_36 = arith.constant 3.906250e-03 : f32
      %47 = vector.broadcast %cst_36 : f32 to vector<4x1xf32>
      %48 = arith.mulf %46, %47 : vector<4x1xf32>
      %49 = arith.mulf %44, %44 : vector<4x1xf32>
      %50 = arith.subf %48, %49 : vector<4x1xf32>
      %cst_37 = arith.constant 9.99999974E-6 : f32
      %51 = vector.broadcast %cst_37 : f32 to vector<4x1xf32>
      %52 = arith.addf %50, %51 : vector<4x1xf32>
      %53 = math.rsqrt %52 : vector<4x1xf32>
      %c0_38 = arith.constant 0 : index
      %c0_39 = arith.constant 0 : index
      %c0_40 = arith.constant 0 : index
      %54 = vector.load %arg5[%c0_38, %c0_39, %c0_40] : memref<1x4x256xf32, #tpu.memory_space<vmem>>, vector<1x4x256xf32>
      %55 = vector.shape_cast %54 : vector<1x4x256xf32> to vector<4x256xf32>
      %56 = vector.broadcast %44 : vector<4x1xf32> to vector<4x256xf32>
      %57 = arith.subf %55, %56 : vector<4x256xf32>
      %58 = vector.broadcast %53 : vector<4x1xf32> to vector<4x256xf32>
      %59 = arith.mulf %57, %58 : vector<4x256xf32>
      %c0_41 = arith.constant 0 : index
      %c0_42 = arith.constant 0 : index
      %c0_43 = arith.constant 0 : index
      %60 = vector.load %arg5[%c0_41, %c0_42, %c0_43] : memref<1x4x256xf32, #tpu.memory_space<vmem>>, vector<1x4x256xf32>
      %61 = vector.shape_cast %60 : vector<1x4x256xf32> to vector<4x256xf32>
      %62 = vector.shape_cast %59 : vector<4x256xf32> to vector<1x4x256xf32>
      tpu.vector_store %arg5[%c0_41, %c0_42, %c0_43], %62 {strides = array<i32>} : memref<1x4x256xf32, #tpu.memory_space<vmem>>, vector<1x4x256xf32>,
    } else {
    }
    return
  }
  func.func @transform_0(%arg0: i32, %arg1: i32) -> (i32, i32) {
    %c0_i32 = arith.constant 0 : i32
    %c0_i32_0 = arith.constant 0 : i32
    %c0_i32_1 = arith.constant 0 : i32
    return %c0_i32, %c0_i32_0 : i32, i32
  }
  func.func @transform_1(%arg0: i32, %arg1: i32) -> (i32, i32) {
    %c0_i32 = arith.constant 0 : i32
    %c0_i32_0 = arith.constant 0 : i32
    %c0_i32_1 = arith.constant 0 : i32
    return %c0_i32, %c0_i32_0 : i32, i32
  }
  func.func @transform_2(%arg0: i32, %arg1: i32) -> (i32, i32, i32) {
    %c0_i32 = arith.constant 0 : i32
    %c0_i32_0 = arith.constant 0 : i32
    return %arg0, %c0_i32, %arg1 : i32, i32, i32
  }
  func.func @transform_3(%arg0: i32, %arg1: i32) -> (i32, i32, i32) {
    %c0_i32 = arith.constant 0 : i32
    %c0_i32_0 = arith.constant 0 : i32
    %c0_i32_1 = arith.constant 0 : i32
    return %arg0, %c0_i32, %c0_i32_0 : i32, i32, i32
  }
}

</mosaic_0001>

<llo_original>
// kernel: tpu_custom_call.1
$region0: #{tpu_custom_call.1}
  #allocation0 [shape = 'u32[]', space=smem, size = 0x4, offset = 0x4, fixed_abs, tag = 'smem constant byte address 0x4 - core index']
  #allocation1 [shape = 'u32[72,128]{1,0:T(1,128)}', space=vmem, size = 0x9000, scoped, tag = 'internal scratch']
  #allocation2 [shape = 'f32[1,4,1]{2,1,0:T(4,128)}', space=vmem, size = 0x800, scoped, tag = 'scratch operand']
  #allocation3 [shape = 'f32[1,4,1]{2,1,0:T(4,128)}', space=vmem, size = 0x800, scoped, tag = 'scratch operand']
  %s0 = inlined_call_operand.vmem [shape: f32[4,4], index: 0, kind: input, shape index: {}]
  %s1 = inlined_call_operand.vmem [shape: f32[4,1], index: 1, kind: input, shape index: {}]
  %s2 = inlined_call_operand.hbm [shape: f32[2,4,256], index: 2, kind: input, shape index: {}]
  %s3 = inlined_call_operand.hbm [shape: f32[2,4,256], index: 3, kind: output, shape index: {}]
  %s4 = sld [smem:[#allocation0]]
  $region57: #{tpu_custom_call.1} parent=0
    _
  %s6 = ssub.s32 1, %s4
  %s7 = scalar_select 0, %s6, %s4
  $region1: #{tpu_custom_call.1} parent=0
    #allocation4 [shape = 'u8[8192]{0}', space=vmem, size = 0x2000, scoped, tag = 'input window, operand 2']
    #allocation5 [shape = 's32[2]{0}', space=sflag, size = 0x8, scoped, tag = 'scoped memory for tpu_custom_call.1']
    #allocation6 [shape = 's32[2]{0}', space=sflag, size = 0x8, scoped, tag = 'scoped memory for tpu_custom_call.1']
    #allocation7 [shape = 'u8[8192]{0}', space=vmem, size = 0x2000, scoped, tag = 'output window, operand 0']
    %8 = vsyncpa [#allocation5], 0
    %s9 = scalar_lea.sflag [#allocation5], 1
    %10 = vsyncpa %s9, 0
    %11 = vsyncpa [#allocation6], 0
    %s12 = scalar_lea.sflag [#allocation6], 1
    %13 = vsyncpa %s12, 0
    loop: start=0, step=1, limit=4
    $region2: #{tpu_custom_call.1} parent=1 // loop_pre_header
      _
    $region3: #{tpu_custom_call.1} parent=1 // loop_header
      %s15 = sphi 0, %s19
      %p16 = scmp.ge.s32.totalorder %s15, 4
      %s22 = sphi 0, %s34
      %s23 = sphi 0, %s30
      %s24 = sphi 0, %s22
      %s25 = sphi 0, %s23
      %s26 = sphi 0, %s24
      %s27 = sphi 0, %s25
      %s35 = sphi 0, %s35
      %s37 = sphi 0, %s35
      %s38 = sphi 0, %s37
      %s52 = sphi 0, %s38
      %s56 = sphi 0, %s56
      %s58 = sphi 0, %s56
      %s59 = sphi 0, %s58
      %s73 = sphi 0, %s59
      %s81 = sphi 0, %s83
      %s84 = sphi 0, %s81
      %s85 = sphi 0, %s84
      %s101 = sphi 0, %s85
      %s107 = sphi 0, %s109
      %s110 = sphi 0, %s107
      %s111 = sphi 0, %s110
      %s127 = sphi 0, %s111
    $region4: #{tpu_custom_call.1} parent=1 // loop_header_branch
      %18 = sbr.rel (%p16) target = $region8
    $region5: #{tpu_custom_call.1} parent=1 // loop_body
      %s20 = ssub.s32 %s15, 1
      %s21 = ssub.s32 %s15, 2
      %s28 = sadd.s32 1, %s23
      %p29 = scmp.ge.s32.totalorder %s28, 1
      %s30 = scalar_select %p29, 0, %s28
      %s31 = sadd.s32 1, %s22
      %s32 = scalar_select %p29, %s31, %s22
      %p33 = scmp.ge.s32.totalorder %s32, 2
      %s34 = scalar_select %p33, 0, %s32
      %s36 = sadd.s32 %s35, 1
      %p39 = scmp.eq.s32.totalorder %s15, 1
      %p40 = scmp.ne.s32.totalorder %s35, %s37
      %p41 = scmp.eq.s32.totalorder %s15, 0
      %p42 = por %p40, %p41
      %p43 = scmp.ne.s32.totalorder %s35, %s37
      %p44 = scmp.eq.s32.totalorder %s20, 1
      %p45 = por %p43, %p44
      %p46 = scmp.ne.s32.totalorder %s37, %s38
      %p47 = scmp.eq.s32.totalorder %s20, 0
      %p48 = por %p46, %p47
      %p49 = scmp.ne.s32.totalorder %s37, %s38
      %p50 = scmp.eq.s32.totalorder %s21, 1
      %p51 = por %p49, %p50
      %p53 = scmp.ne.s32.totalorder %s38, %s52
      %p54 = scmp.eq.s32.totalorder %s21, 0
      %p55 = por %p53, %p54
      %s57 = sadd.s32 %s56, 1
      %p60 = scmp.eq.s32.totalorder %s15, 1
      %p61 = scmp.ne.s32.totalorder %s56, %s58
      %p62 = scmp.eq.s32.totalorder %s15, 0
      %p63 = por %p61, %p62
      %p64 = scmp.ne.s32.totalorder %s56, %s58
      %p65 = scmp.eq.s32.totalorder %s20, 1
      %p66 = por %p64, %p65
      %p67 = scmp.ne.s32.totalorder %s58, %s59
      %p68 = scmp.eq.s32.totalorder %s20, 0
      %p69 = por %p67, %p68
      %p70 = scmp.ne.s32.totalorder %s58, %s59
      %p71 = scmp.eq.s32.totalorder %s21, 1
      %p72 = por %p70, %p71
      %p74 = scmp.ne.s32.totalorder %s59, %s73
      %p75 = scmp.eq.s32.totalorder %s21, 0
      %p76 = por %p74, %p75
      %s77 = ssub.s32 %s22, %s34
      %s78 = ssub.s32 %s23, %s30
      %s79 = sor.u32 %s77, %s78
      %p80 = scmp.eq.s32.totalorder %s79, 0
      %s82 = sadd.s32 %s81, 1
      %s83 = scalar_select %p80, %s81, %s82
      %p86 = pneg %p80
      %p87 = scmp.eq.s32.totalorder %s15, 1
      %p88 = por %p86, %p87
      %p89 = scmp.ne.s32.totalorder %s81, %s84
      %p90 = scmp.eq.s32.totalorder %s15, 0
      %p91 = por %p89, %p90
      %p92 = scmp.ne.s32.totalorder %s81, %s84
      %p93 = scmp.eq.s32.totalorder %s20, 1
      %p94 = por %p92, %p93
      %p95 = scmp.ne.s32.totalorder %s84, %s85
      %p96 = scmp.eq.s32.totalorder %s20, 0
      %p97 = por %p95, %p96
      %p98 = scmp.ne.s32.totalorder %s84, %s85
      %p99 = scmp.eq.s32.totalorder %s21, 1
      %p100 = por %p98, %p99
      %p102 = scmp.ne.s32.totalorder %s85, %s101
      %p103 = scmp.eq.s32.totalorder %s21, 0
      %p104 = por %p102, %p103
      %s105 = ssub.s32 %s22, %s34
      %p106 = scmp.eq.s32.totalorder %s105, 0
      %s108 = sadd.s32 %s107, 1
      %s109 = scalar_select %p106, %s107, %s108
      %p112 = pneg %p106
      %p113 = scmp.eq.s32.totalorder %s15, 1
      %p114 = por %p112, %p113
      %p115 = scmp.ne.s32.totalorder %s107, %s110
      %p116 = scmp.eq.s32.totalorder %s15, 0
      %p117 = por %p115, %p116
      %p118 = scmp.ne.s32.totalorder %s107, %s110
      %p119 = scmp.eq.s32.totalorder %s20, 1
      %p120 = por %p118, %p119
      %p121 = scmp.ne.s32.totalorder %s110, %s111
      %p122 = scmp.eq.s32.totalorder %s20, 0
      %p123 = por %p121, %p122
      %p124 = scmp.ne.s32.totalorder %s110, %s111
      %p125 = scmp.eq.s32.totalorder %s21, 1
      %p126 = por %p124, %p125
      %p128 = scmp.ne.s32.totalorder %s111, %s127
      %p129 = scmp.eq.s32.totalorder %s21, 0
      %p130 = por %p128, %p129
      %p131 = scmp.le.s32.totalorder 1, %s15
      %p132 = scmp.lt.s32.totalorder %s15, 3
      %p133 = pnand %p131, %p132
      %p134 = pneg %p133
      // Predicated region
      $region9: #{tpu_custom_call.1} parent=5 // pred_check
        _
      $region10: #{tpu_custom_call.1} parent=5 // pred_check_branch
        %136 = sbr.rel (%p133) target = $region12
      $region11: #{tpu_custom_call.1} parent=5 // pred_region
        %s137 = ssub.s32 %s15, 1
        // Predicated region
        $region13: #{tpu_custom_call.1} parent=11 // pred_check
          %p138 = pneg %p48
        $region14: #{tpu_custom_call.1} parent=11 // pred_check_branch
          %140 = sbr.rel (%p138) target = $region16
        $region15: #{tpu_custom_call.1} parent=11 // pred_region
          _
        $region16: #{tpu_custom_call.1} parent=11 // pred_fallthru
          _
        // Predicated region
        $region17: #{tpu_custom_call.1} parent=11 // pred_check
          %p141 = pneg %p69
        $region18: #{tpu_custom_call.1} parent=11 // pred_check_branch
          %143 = sbr.rel (%p141) target = $region20
        $region19: #{tpu_custom_call.1} parent=11 // pred_region
          _
        $region20: #{tpu_custom_call.1} parent=11 // pred_fallthru
          _
      $region12: #{tpu_custom_call.1} parent=5 // pred_fallthru
        _
      %p144 = scmp.lt.s32.totalorder %s15, 2
      // Predicated region
      $region21: #{tpu_custom_call.1} parent=5 // pred_check
        %p145 = pneg %p144
      $region22: #{tpu_custom_call.1} parent=5 // pred_check_branch
        %147 = sbr.rel (%p145) target = $region24
      $region23: #{tpu_custom_call.1} parent=5 // pred_region
        // Predicated region
        $region25: #{tpu_custom_call.1} parent=23 // pred_check
          %p148 = pneg %p91
        $region26: #{tpu_custom_call.1} parent=23 // pred_check_branch
          %150 = sbr.rel (%p148) target = $region28
        $region27: #{tpu_custom_call.1} parent=23 // pred_region
          %s151 = sand.u32 %s81, 1
          %s152 = scalar_lea.sflag [#allocation5], %s151
          %s153 = sand.u32 %s81, 1
          %s154 = smul.addr %s153, 8
          %s155 = scalar_lea.vmem [#allocation4], %s154
          %s156 = smul.u32 2, %s23
          %158 = vsyncadd %s152, 0
          %s159 = smul.addr %s22, 2
          %s160 = sadd.s32 %s156, %s159
          %s161 = smul.addr %s160, 4
          %s162 = scalar_lea.hbm %s2, %s161
          %s164 = sshll.u32 %s162, 4
          %s165 = int_to_ptr.hbm [resolvable:$true] %s164
          %s166 = sshll.u32 %s155, 4
          %s167 = int_to_ptr.vmem [resolvable:$true] %s166
          %169 = dma.hbm_to_vmem [thread:$0]  %s165, 128, %s167, %s152
        $region28: #{tpu_custom_call.1} parent=23 // pred_fallthru
          _
      $region24: #{tpu_custom_call.1} parent=5 // pred_fallthru
        _
      %p170 = scmp.le.s32.totalorder 1, %s15
      %p171 = scmp.lt.s32.totalorder %s15, 3
      %p172 = pnand %p170, %p171
      %p173 = pneg %p172
      // Predicated region
      $region29: #{tpu_custom_call.1} parent=5 // pred_check
        _
      $region30: #{tpu_custom_call.1} parent=5 // pred_check_branch
        %175 = sbr.rel (%p172) target = $region32
      $region31: #{tpu_custom_call.1} parent=5 // pred_region
        %s176 = ssub.s32 %s15, 1
        %s177 = sand.u32 %s84, 1
        %s178 = scalar_lea.sflag [#allocation5], %s177
        %s179 = sand.u32 %s84, 1
        %s180 = smul.addr %s179, 8
        %s181 = scalar_lea.vmem [#allocation4], %s180
        // Predicated region
        $region33: #{tpu_custom_call.1} parent=31 // pred_check
          %p182 = pneg %p97
        $region34: #{tpu_custom_call.1} parent=31 // pred_check_branch
          %184 = sbr.rel (%p182) target = $region36
        $region35: #{tpu_custom_call.1} parent=31 // pred_region
          %186 = dma.done %s178, 128
        $region36: #{tpu_custom_call.1} parent=31 // pred_fallthru
          _
        %p187 = pneg %p48
        %p188 = pneg %p45
        %p189 = pneg %p69
        %p190 = pneg %p66
        %s191 = sand.u32 %s84, 1
        %s192 = scalar_lea.sflag [#allocation5], %s191
        %s193 = sand.u32 %s84, 1
        %s194 = smul.addr %s193, 8
        %s195 = scalar_lea.vmem [#allocation4], %s194
        %p196 = pneg %p97
        %p197 = pneg %p94
        %p198 = pneg %p123
        %p199 = pneg %p120
        %s200 = sand.u32 %s110, 1
        %s201 = scalar_lea.sflag [#allocation6], %s200
        %s202 = sand.u32 %s110, 1
        %s203 = smul.addr %s202, 8
        %s204 = scalar_lea.vmem [#allocation7], %s203
        %s205 = smul.u32 2, %s25
        %p206 = scmp.eq.s32.totalorder %s25, 0
        // Predicated region
        $region37: #{tpu_custom_call.1} parent=31 // pred_check
          %p207 = pneg %p206
        $region38: #{tpu_custom_call.1} parent=31 // pred_check_branch
          %209 = sbr.rel (%p207) target = $region40
        $region39: #{tpu_custom_call.1} parent=31 // pred_region
          %vm210 = vcmask 3072
          %211 = vst.msk [vmem:[#allocation2] sm:$0xf] %vm210, 0.0
          %212 = vst.msk [vmem:[#allocation3] sm:$0xf] %vm210, 0.0
        $region40: #{tpu_custom_call.1} parent=31 // pred_fallthru
          _
        %v213 = vld [vmem:[%s0] sm:$0xf]
        %v214 = vld [vmem:[%s1] sm:$0xf]
        %v215 = vld [vmem:[%s181] sm:$0xff]
        %217 = vset.pattern.permute.xlu0 0
        %218 = vperm.xlu0 %217, %v214
        %v219 = vpop.permute.xlu0 %218
        %222 = vst [vmem:[#allocation1] ss:$2 sm:$0xff] %v215
        %v223 = vld.sshfl [vmem:[#allocation1] sm:$0xff pattern:$0x75316420]
        %v224 = vld.sshfl [vmem:[#allocation1 + $0x8] sm:$0xff pattern:$0x75316420]
        %vm225 = vcmask 31744
        %v227 = vsel %vm225, %v213, 0
        %vm229 = vcmask 1043456
        %v230 = vsel %vm229, %v223, 0
        %v232 = vsel %vm229, %v224, 0
        %234 = vmatpush.msra.mxu0 0.0
        %235 = vmatpush.msra.mxu0 0.0
        %236 = vmatpush.msra.mxu0 0.0
        %237 = vmatpush.msra.mxu0 0.0
        %238 = vmatpush.msra.mxu0 0.0
        %239 = vmatpush.msra.mxu0 0.0
        %240 = vmatpush.msra.mxu0 0.0
        %241 = vmatpush.msra.mxu0 0.0
        %242 = vmatpush.msra.mxu0 0.0
        %243 = vmatpush.msra.mxu0 0.0
        %244 = vmatpush.msra.mxu0 0.0
        %245 = vmatpush.msra.mxu0 0.0
        %246 = vmatpush.msra.mxu0 0.0
        %247 = vmatpush.msra.mxu0 0.0
        %248 = vmatpush.msra.mxu0 0.0
        %249 = vmatpush.msra.mxu0 %v230
        %250 = vmatmul.f32.gmra.mxu0 %v227
        %v251 = vpop.f32.mrf.mxu0
        %v252 = vadd.f32 %v219, %v251
        %253 = vdwg.mxu0
        %254 = vmatpush.msra.mxu0 0.0
        %255 = vmatpush.msra.mxu0 0.0
        %256 = vmatpush.msra.mxu0 0.0
        %257 = vmatpush.msra.mxu0 0.0
        %258 = vmatpush.msra.mxu0 0.0
        %259 = vmatpush.msra.mxu0 0.0
        %260 = vmatpush.msra.mxu0 0.0
        %261 = vmatpush.msra.mxu0 0.0
        %262 = vmatpush.msra.mxu0 0.0
        %263 = vmatpush.msra.mxu0 0.0
        %264 = vmatpush.msra.mxu0 0.0
        %265 = vmatpush.msra.mxu0 0.0
        %266 = vmatpush.msra.mxu0 0.0
        %267 = vmatpush.msra.mxu0 0.0
        %268 = vmatpush.msra.mxu0 0.0
        %269 = vmatpush.msra.mxu0 %v232
        %270 = vmatmul.f32.gmra.mxu0 %v227
        %v271 = vpop.f32.mrf.mxu0
        %v272 = vadd.f32 %v219, %v271
        %273 = vdwg.mxu0
        %v274 = vmul.f32 %v252, 0.5
        %v275 = vmul.f32 %v272, 0.5
        %v276 = vmul.f32 %v252, 0.70710677
        %v277 = vmul.f32 %v272, 0.70710677
        %v278 = vmul.f32 %v276, %v276
        %v279 = vmin.f32 16.0, %v278
        %v280 = vmul.f32 %v279, 2.1237322e-06
        %v281 = vadd.f32 %v280, 0.00028619796
        %v282 = vmul.f32 %v279, %v281
        %v283 = vadd.f32 %v282, 0.0036580483
        %v284 = vmul.f32 %v279, %v283
        %v285 = vadd.f32 %v284, 0.05243302
        %v286 = vmul.f32 %v279, %v285
        %v287 = vadd.f32 %v286, 0.18741608
        %v288 = vmul.f32 %v279, %v287
        %v289 = vadd.f32 %v288, 1.1283791
        %v290 = vmul.f32 %v276, %v289
        %v291 = vmul.f32 %v279, 3.8918573e-05
        %v292 = vadd.f32 %v291, 0.001143296
        %v293 = vmul.f32 %v279, %v292
        %v294 = vadd.f32 %v293, 0.014752088
        %v295 = vmul.f32 %v279, %v294
        %v296 = vadd.f32 %v295, 0.112945676
        %v297 = vmul.f32 %v279, %v296
        %v298 = vadd.f32 %v297, 0.4994258
        %v299 = vmul.f32 %v279, %v298
        %v300 = vadd.f32 %v299, 1.0
        %v301 = vrcp.pop %v300
        %v302 = vmul.f32 %v300, %v301
        %v303 = vsub.f32 1.0, %v302
        %v304 = vmul.f32 %v301, %v303
        %v305 = vadd.f32 %v301, %v304
        %vm306 = vweird.f32 %v300
        %vm307 = vweird.f32 %v301
        %vm308 = vmor %vm306, %vm307
        %v309 = vsel %vm308, %v301, %v305
        %v310 = vand.u32 2147483647, %v300
        %vm311 = vcmp.eq.f32.partialorder %v310, 8.507059e+37
        %v312 = vand.u32 %v300, 2147483648
        %v313 = vor.u32 1.1754944e-38, %v312
        %v314 = vsel %vm311, %v313, %v309
        %v315 = vmul.f32 %v290, %v314
        %v316 = vmin.f32 %v315, 1.0
        %v317 = vmax.f32 %v316, -1.0
        %v318 = vmul.f32 %v277, %v277
        %v319 = vmin.f32 16.0, %v318
        %v320 = vmul.f32 %v319, 2.1237322e-06
        %v321 = vadd.f32 %v320, 0.00028619796
        %v322 = vmul.f32 %v319, %v321
        %v323 = vadd.f32 %v322, 0.0036580483
        %v324 = vmul.f32 %v319, %v323
        %v325 = vadd.f32 %v324, 0.05243302
        %v326 = vmul.f32 %v319, %v325
        %v327 = vadd.f32 %v326, 0.18741608
        %v328 = vmul.f32 %v319, %v327
        %v329 = vadd.f32 %v328, 1.1283791
        %v330 = vmul.f32 %v277, %v329
        %v331 = vmul.f32 %v319, 3.8918573e-05
        %v332 = vadd.f32 %v331, 0.001143296
        %v333 = vmul.f32 %v319, %v332
        %v334 = vadd.f32 %v333, 0.014752088
        %v335 = vmul.f32 %v319, %v334
        %v336 = vadd.f32 %v335, 0.112945676
        %v337 = vmul.f32 %v319, %v336
        %v338 = vadd.f32 %v337, 0.4994258
        %v339 = vmul.f32 %v319, %v338
        %v340 = vadd.f32 %v339, 1.0
        %v341 = vrcp.pop %v340
        %v342 = vmul.f32 %v340, %v341
        %v343 = vsub.f32 1.0, %v342
        %v344 = vmul.f32 %v341, %v343
        %v345 = vadd.f32 %v341, %v344
        %vm346 = vweird.f32 %v340
        %vm347 = vweird.f32 %v341
        %vm348 = vmor %vm346, %vm347
        %v349 = vsel %vm348, %v341, %v345
        %v350 = vand.u32 2147483647, %v340
        %vm351 = vcmp.eq.f32.partialorder %v350, 8.507059e+37
        %v352 = vand.u32 %v340, 2147483648
        %v353 = vor.u32 1.1754944e-38, %v352
        %v354 = vsel %vm351, %v353, %v349
        %v355 = vmul.f32 %v330, %v354
        %v356 = vmin.f32 %v355, 1.0
        %v357 = vmax.f32 %v356, -1.0
        %v358 = vadd.f32 %v317, 1.0
        %v359 = vadd.f32 %v357, 1.0
        %v360 = vmul.f32 %v274, %v358
        %v361 = vmul.f32 %v275, %v359
        %v362 = vld [vmem:[#allocation2] sm:$0xf]
        %v363 = vsel %vm229, %v360, 0.0
        %v364 = vsel %vm229, %v361, 0.0
        %v365 = vadd.f32 %v363, %v364
        %366 = vadd.xlane.f32.xlu0 %v365
        %v367 = vpop.xlane.xlu0 %366
        %v368 = vadd.f32 %v362, %v367
        %vm369 = vcmask 3072
        %370 = vst.msk [vmem:[#allocation2] sm:$0xf] %vm369, %v368
        %v371 = vld [vmem:[#allocation3] sm:$0xf]
        %v372 = vmul.f32 %v360, %v360
        %v373 = vmul.f32 %v361, %v361
        %v374 = vsel %vm229, %v372, 0.0
        %v375 = vsel %vm229, %v373, 0.0
        %v376 = vadd.f32 %v374, %v375
        %377 = vadd.xlane.f32.xlu0 %v376
        %v378 = vpop.xlane.xlu0 %377
        %v379 = vadd.f32 %v371, %v378
        %380 = vst.msk [vmem:[#allocation3] sm:$0xf] %vm369, %v379
        %v383 = vrot.slane %v361, 4
        %v384 = vsel %vm229, %v360, %v383
        %386 = vst [vmem:[%s204] sm:$0xff] %v384
        // Predicated region
        $region41: #{tpu_custom_call.1} parent=31 // pred_check
          %p387 = pneg %p206
        $region42: #{tpu_custom_call.1} parent=31 // pred_check_branch
          %389 = sbr.rel (%p387) target = $region44
        $region43: #{tpu_custom_call.1} parent=31 // pred_region
          %v390 = vld [vmem:[#allocation2] sm:$0xf]
          %v391 = vmul.f32 %v390, 0.00390625
          %v392 = vld [vmem:[#allocation3] sm:$0xf]
          %v393 = vmul.f32 %v392, 0.00390625
          %v394 = vmul.f32 %v391, %v391
          %v395 = vsub.f32 %v393, %v394
          %v396 = vadd.f32 %v395, 1e-05
          %v397 = vrsqrt.pop %v396
          %v398 = vmul.f32 %v397, %v396
          %v399 = vmul.f32 %v398, %v397
          %v400 = vmul.f32 0.5, %v399
          %v401 = vsub.f32 1.5, %v400
          %v402 = vmul.f32 %v397, %v401
          %vm403 = vweird.f32 %v396
          %vm404 = vweird.f32 %v397
          %vm405 = vmor %vm403, %vm404
          %v406 = vsel %vm405, %v397, %v402
          %v407 = vld [vmem:[%s204] sm:$0xff]
          %409 = vset.pattern.permute.xlu0 0
          %410 = vperm.xlu0 %409, %v391
          %v411 = vpop.permute.xlu0 %410
          %v413 = vunpack.c.l.s4 839922192
          %v414 = vunpack.c.0.s8 %v413
          %v415 = vperm.slane %v411, %v414
          %v417 = vsub.f32 %v407, %v415
          %419 = vset.pattern.permute.xlu0 0
          %420 = vperm.xlu0 %419, %v406
          %v421 = vpop.permute.xlu0 %420
          %v423 = vunpack.c.l.s4 839922192
          %v424 = vunpack.c.0.s8 %v423
          %v425 = vperm.slane %v421, %v424
          %v427 = vmul.f32 %v417, %v425
          %428 = vst [vmem:[%s204] sm:$0xff] %v427
        $region44: #{tpu_custom_call.1} parent=31 // pred_fallthru
          _
        %s429 = sand.u32 %s110, 1
        %s430 = scalar_lea.sflag [#allocation6], %s429
        %s431 = sand.u32 %s110, 1
        %s432 = smul.addr %s431, 8
        %s433 = scalar_lea.vmem [#allocation7], %s432
        // Predicated region
        $region45: #{tpu_custom_call.1} parent=31 // pred_check
          %p434 = pneg %p120
        $region46: #{tpu_custom_call.1} parent=31 // pred_check_branch
          %436 = sbr.rel (%p434) target = $region48
        $region47: #{tpu_custom_call.1} parent=31 // pred_region
          %438 = vsyncadd %s430, 0
          %s439 = smul.addr %s24, 2
          %s440 = smul.addr %s439, 4
          %s441 = scalar_lea.hbm %s3, %s440
          %s443 = sshll.u32 %s433, 4
          %s444 = int_to_ptr.vmem [resolvable:$true] %s443
          %s445 = sshll.u32 %s441, 4
          %s446 = int_to_ptr.hbm [resolvable:$true] %s445
          %448 = dma.vmem_to_hbm [thread:$0]  %s444, 128, %s446, %s430
        $region48: #{tpu_custom_call.1} parent=31 // pred_fallthru
          _
      $region32: #{tpu_custom_call.1} parent=5 // pred_fallthru
        _
      %p449 = scmp.le.s32.totalorder 2, %s15
      // Predicated region
      $region49: #{tpu_custom_call.1} parent=5 // pred_check
        %p450 = pneg %p449
      $region50: #{tpu_custom_call.1} parent=5 // pred_check_branch
        %452 = sbr.rel (%p450) target = $region52
      $region51: #{tpu_custom_call.1} parent=5 // pred_region
        %s453 = ssub.s32 %s15, 2
        // Predicated region
        $region53: #{tpu_custom_call.1} parent=51 // pred_check
          %p454 = pneg %p126
        $region54: #{tpu_custom_call.1} parent=51 // pred_check_branch
          %456 = sbr.rel (%p454) target = $region56
        $region55: #{tpu_custom_call.1} parent=51 // pred_region
          %s457 = sand.u32 %s111, 1
          %s458 = scalar_lea.sflag [#allocation6], %s457
          %s459 = sand.u32 %s111, 1
          %s460 = smul.addr %s459, 8
          %s461 = scalar_lea.vmem [#allocation7], %s460
          %463 = dma.done %s458, 128
        $region56: #{tpu_custom_call.1} parent=51 // pred_fallthru
          _
      $region52: #{tpu_custom_call.1} parent=5 // pred_fallthru
        _
    $region6: #{tpu_custom_call.1} parent=1 // loop_footer
      %s19 = sadd.s32 1, %s15
    $region7: #{tpu_custom_call.1} parent=1 // loop_footer_branch
      %14 = sbr.rel target = $region3
    $region8: #{tpu_custom_call.1} parent=1 // loop_exit
      _
    %464 = vsyncpa [#allocation5], 1
    %s465 = scalar_lea.sflag [#allocation5], 1
    %466 = vsyncpa %s465, 1
    %467 = vsyncpa [#allocation6], 1
    %s468 = scalar_lea.sflag [#allocation6], 1
    %469 = vsyncpa %s468, 1

</llo_original>
